<compile_context>
chip_gen: v7x
topology: tpu7x:2x2x1
jax: 0.10.0
libtpu: 0.0.40
codegen_flags: <defaults>
</compile_context>

<pallas_src>
import math

import jax
import jax.numpy as jnp
from jax.experimental import pallas as pl
from jax.experimental.pallas import tpu as pltpu


MIN_E = 0.4
MAX_E = 1.1
_OUT_PAD = 8      # final-layer padded width (full-array last dim => legal block)
_HID_PAD = 128    # hidden widths padded up to a multiple of this (lane-dense)


def _round_up(x, m):
    return ((x + m - 1) // m) * m


def _make_att_sq_kernel(n_layers, max_e, min_e, compute_dtype):
    """Kernel closure for a given static number of Linear layers."""

    def kernel(*refs):
        # refs = (x_ref, w0, b0, w1, b1, ..., out_ref)
        x_ref = refs[0]
        out_ref = refs[-1]
        wb = refs[1:-1]

        # f32 tile from HBM, cast to bf16 in-register (VPU, hidden under DMA).
        h = x_ref[...].astype(compute_dtype)          # (tm, F)
        for i in range(n_layers):
            w = wb[2 * i][...]                        # (in_pad, out_pad), bf16
            b = wb[2 * i + 1][...]                    # (1, out_pad), f32
            acc = jnp.dot(h, w, preferred_element_type=jnp.float32) + b
            if i < n_layers - 1:
                acc = jnp.maximum(acc, 0.0)           # nn.ReLU (f32)
                h = acc.astype(compute_dtype)         # bf16 operands for MXU
            else:
                # torch.sigmoid(...) * max_e + min_e  (f32 elementwise, 8 lanes)
                out_ref[...] = jax.nn.sigmoid(acc) * max_e + min_e

    return kernel


def att_sq_shape_forward(X, params, *, max_e=MAX_E, min_e=MIN_E,
                         compute_dtype=jnp.bfloat16, tile_rows=2048):
    """JAX/Pallas equivalent of AttSQShape.forward.

    X:      (B, M, F) float32 per-primitive features.
    params: list of (W, b) pairs; W has shape (in, out), b has shape (1, out).
            The last layer's `out` must be 2.
    Returns: shapes of shape (B, M*2).
    """
    B, M, F = X.shape
    n_layers = len(params)
    n_rows = B * M
    out_dim = params[-1][0].shape[1]                 # 2

    # Row tile: multiple of 16 (bf16 sublane packing), capped, and sized so
    # the grid has >= 2 steps when there is enough work (megacore on v7x).
    tm = min(tile_rows, _round_up(max(pl.cdiv(n_rows, 2), 8), 16))
    tm = max(tm, 16)

    # No full-array cast/pad of X: reshape is free; only pad the tiny case
    # where a single block would exceed the array's row extent.
    x2d = X.reshape(n_rows, F)
    rows_total = n_rows
    if n_rows < tm:
        x2d = jnp.pad(x2d, ((0, tm - n_rows), (0, 0)))
        rows_total = tm
    grid = (pl.cdiv(rows_total, tm),)

    # Pre-pad weights/biases: hidden widths -> multiple of 128 (lane-dense
    # ReLU/bias/cast), final width -> _OUT_PAD; input rows of layer i+1 are
    # padded with zeros to match layer i's padded output (no-op numerically).
    flat_params = []
    unpadded_dims = []
    prev_pad_out = F
    for li, (W, b) in enumerate(params):
        fin, fout = W.shape
        unpadded_dims.append((fin, fout))
        if prev_pad_out > fin:
            W = jnp.pad(W, ((0, prev_pad_out - fin), (0, 0)))
        if li == n_layers - 1:
            fout_pad = _OUT_PAD
        else:
            fout_pad = max(_round_up(fout, _HID_PAD), _HID_PAD)
        if fout_pad > fout:
            W = jnp.pad(W, ((0, 0), (0, fout_pad - fout)))
            b = jnp.pad(b, ((0, 0), (0, fout_pad - fout)))
        flat_params.append(W.astype(compute_dtype))
        flat_params.append(b.astype(jnp.float32))
        prev_pad_out = fout_pad

    kernel = _make_att_sq_kernel(n_layers, max_e, min_e, compute_dtype)

    # x tiled along rows; weights/biases use constant index maps so they stay
    # VMEM-resident across the whole grid.
    in_specs = [pl.BlockSpec((tm, F), lambda i: (i, 0))]
    for p in flat_params:
        in_specs.append(pl.BlockSpec(p.shape, lambda i: (0, 0)))
    out_specs = pl.BlockSpec((tm, _OUT_PAD), lambda i: (i, 0))

    # Advisory cost estimate from the UNPADDED dims.
    flops = 2 * n_rows * sum(k * n for k, n in unpadded_dims)
    transcendentals = 2 * n_rows * out_dim           # exp + reciprocal per sigmoid
    param_bytes = sum(int(p.size) * p.dtype.itemsize for p in flat_params)
    bytes_accessed = (int(x2d.size) * 4              # f32 X read
                      + rows_total * _OUT_PAD * 4    # f32 output write
                      + param_bytes)
    cost = pl.CostEstimate(flops=int(flops),
                           transcendentals=int(transcendentals),
                           bytes_accessed=int(bytes_accessed))

    # VMEM budget: double-buffered x/out tiles (f32) + resident params +
    # headroom for intermediates; capped at ~3/4 of physical VMEM so it fits
    # v7x (64 MiB) without starving compiler scratch, while still letting
    # v5e/v6e (128 MiB) use larger tiles.
    vmem_need = (2 * (tm * F * 4 + tm * _OUT_PAD * 4)
                 + 2 * param_bytes + (8 << 20))
    try:
        phys_vmem = int(pltpu.get_tpu_info().vmem_capacity_bytes)
        vmem_cap = (phys_vmem * 3) // 4
    except Exception:  # pragma: no cover - conservative fallback
        vmem_cap = 48 << 20
    vmem_limit = int(min(max(vmem_need, 16 << 20), vmem_cap))

    out2d = pl.pallas_call(
        kernel,
        out_shape=jax.ShapeDtypeStruct((rows_total, _OUT_PAD), jnp.float32),
        grid=grid,
        in_specs=in_specs,
        out_specs=out_specs,
        compiler_params=pltpu.CompilerParams(
            dimension_semantics=("parallel",),
            vmem_limit_bytes=vmem_limit),
        cost_estimate=cost,
    )(x2d, *flat_params)

    # Strip row + lane padding, then shapes.view(B, -1).
    return out2d[:n_rows, :out_dim].reshape(B, M * out_dim)


def init_att_sq_params(key, input_dims, n_layers, hidden_units):
    """Deterministic init mirroring AttSQShape.__init__ layer shapes
    (PyTorch Linear default: U(-1/sqrt(fan_in), 1/sqrt(fan_in)))."""
    params = []
    in_features = input_dims
    dims = []
    for _ in range(n_layers - 1):
        dims.append((in_features, hidden_units))
        in_features = hidden_units
    dims.append((in_features, 2))

    for (fin, fout) in dims:
        key, kw, kb = jax.random.split(key, 3)
        bound = 1.0 / math.sqrt(fin)
        W = jax.random.uniform(kw, (fin, fout), jnp.float32, -bound, bound)
        b = jax.random.uniform(kb, (1, fout), jnp.float32, -bound, bound)
        params.append((W, b))
    return params


def _reference_forward(X, params, max_e=MAX_E, min_e=MIN_E):
    B, M, F = X.shape
    h = X.reshape(B * M, F)
    for i, (W, b) in enumerate(params):
        h = h @ W + b
        if i < len(params) - 1:
            h = jnp.maximum(h, 0.0)
    out = jax.nn.sigmoid(h) * max_e + min_e
    return out.reshape(B, -1)


if __name__ == "__main__":
    key = jax.random.PRNGKey(0)

    # Test 1: small shapes consistent with the module
    #   B=2, M=8 primitives, feature dim F=32, n_layers=2, hidden_units=32
    #   (exercises the hidden-width padding 32 -> 128).
    B, M, F = 2, 8, 32
    n_layers, hidden_units = 2, 32
    key, kx, kp = jax.random.split(key, 3)
    X = jax.random.normal(kx, (B, M, F), jnp.float32)
    params = init_att_sq_params(kp, F, n_layers, hidden_units)

    out = jax.block_until_ready(att_sq_shape_forward(X, params))
    ref = _reference_forward(X, params)
    assert out.shape == (B, M * 2), out.shape
    # bf16 MXU operands -> looser tolerance vs the pure-f32 reference.
    assert jnp.allclose(out, ref, atol=2e-2, rtol=2e-2), (
        float(jnp.max(jnp.abs(out - ref))))

    # Test 2: larger row count, n_rows not a multiple of the tile
    # (exercises the >=2-step grid + masked ragged last tile).
    B2, M2, F2 = 4, 300, 64
    n_layers2, hidden2 = 3, 128
    key, kx2, kp2 = jax.random.split(key, 3)
    X2 = jax.random.normal(kx2, (B2, M2, F2), jnp.float32)
    params2 = init_att_sq_params(kp2, F2, n_layers2, hidden2)

    out2 = jax.block_until_ready(att_sq_shape_forward(X2, params2))
    ref2 = _reference_forward(X2, params2)
    assert out2.shape == (B2, M2 * 2), out2.shape
    assert jnp.allclose(out2, ref2, atol=2e-2, rtol=2e-2), (
        float(jnp.max(jnp.abs(out2 - ref2))))

    # Test 3: single-layer path (config default n_layers=1).
    B3, M3, F3 = 2, 8, 32
    key, kx3, kp3 = jax.random.split(key, 3)
    X3 = jax.random.normal(kx3, (B3, M3, F3), jnp.float32)
    params3 = init_att_sq_params(kp3, F3, 1, 128)

    out3 = jax.block_until_ready(att_sq_shape_forward(X3, params3))
    ref3 = _reference_forward(X3, params3)
    assert out3.shape == (B3, M3 * 2), out3.shape
    assert jnp.allclose(out3, ref3, atol=2e-2, rtol=2e-2), (
        float(jnp.max(jnp.abs(out3 - ref3))))

    print("KERNEL_OK")
</pallas_src>

<mosaic_0001>
module attributes {stable_mosaic.version = 11 : i64} {
  func.func @kernel(%arg0: i32, %arg1: memref<16x32xf32, #tpu.memory_space<vmem>>, %arg2: memref<32x128xbf16, #tpu.memory_space<vmem>>, %arg3: memref<1x128xf32, #tpu.memory_space<vmem>>, %arg4: memref<128x8xbf16, #tpu.memory_space<vmem>>, %arg5: memref<1x8xf32, #tpu.memory_space<vmem>>, %arg6: memref<16x8xf32, #tpu.memory_space<vmem>>) attributes {dimension_semantics = [#tpu.dimension_semantics<parallel>], iteration_bounds = array<i64: 1>, scalar_prefetch = 0 : i64, scratch_operands = 0 : i64, tpu.core_type = #tpu.core_type<tc>, window_params = [{transform_indices = @transform_0, window_bounds = array<i64: 16, 32>}, {pipeline_mode = #tpu.pipeline_mode<synchronous>, transform_indices = @transform_1, window_bounds = array<i64: 32, 128>}, {pipeline_mode = #tpu.pipeline_mode<synchronous>, transform_indices = @transform_2, window_bounds = array<i64: 1, 128>}, {pipeline_mode = #tpu.pipeline_mode<synchronous>, transform_indices = @transform_3, window_bounds = array<i64: 128, 8>}, {pipeline_mode = #tpu.pipeline_mode<synchronous>, transform_indices = @transform_4, window_bounds = array<i64: 1, 8>}, {transform_indices = @transform_5, window_bounds = array<i64: 16, 8>}]} {
    %c0 = arith.constant 0 : index
    %c0_0 = arith.constant 0 : index
    %0 = vector.load %arg1[%c0, %c0_0] : memref<16x32xf32, #tpu.memory_space<vmem>>, vector<16x32xf32>
    %1 = arith.truncf %0 : vector<16x32xf32> to vector<16x32xbf16>
    %c0_1 = arith.constant 0 : index
    %c0_2 = arith.constant 0 : index
    %2 = vector.load %arg2[%c0_1, %c0_2] : memref<32x128xbf16, #tpu.memory_space<vmem>>, vector<32x128xbf16>
    %c0_3 = arith.constant 0 : index
    %c0_4 = arith.constant 0 : index
    %3 = vector.load %arg3[%c0_3, %c0_4] : memref<1x128xf32, #tpu.memory_space<vmem>>, vector<1x128xf32>
    %cst = arith.constant dense<0.000000e+00> : vector<16x128xf32>
    %4 = tpu.matmul %1, %2, %cst {dimension_numbers = #tpu.dot_dimension_numbers<[1], [0], [0], [1], [0, 0, 1, 1], [], []>} : vector<16x32xbf16>, vector<32x128xbf16>, vector<16x128xf32> -> vector<16x128xf32>
    %5 = vector.broadcast %3 : vector<1x128xf32> to vector<16x128xf32>
    %6 = arith.addf %4, %5 : vector<16x128xf32>
    %cst_5 = arith.constant 0.000000e+00 : f32
    %7 = vector.broadcast %cst_5 : f32 to vector<16x128xf32>
    %8 = arith.maximumf %6, %7 : vector<16x128xf32>
    %9 = arith.truncf %8 : vector<16x128xf32> to vector<16x128xbf16>
    %c0_6 = arith.constant 0 : index
    %c0_7 = arith.constant 0 : index
    %10 = vector.load %arg4[%c0_6, %c0_7] : memref<128x8xbf16, #tpu.memory_space<vmem>>, vector<128x8xbf16>
    %c0_8 = arith.constant 0 : index
    %c0_9 = arith.constant 0 : index
    %11 = vector.load %arg5[%c0_8, %c0_9] : memref<1x8xf32, #tpu.memory_space<vmem>>, vector<1x8xf32>
    %cst_10 = arith.constant dense<0.000000e+00> : vector<16x8xf32>
    %12 = tpu.matmul %9, %10, %cst_10 {dimension_numbers = #tpu.dot_dimension_numbers<[1], [0], [0], [1], [0, 0, 1, 1], [], []>} : vector<16x128xbf16>, vector<128x8xbf16>, vector<16x8xf32> -> vector<16x8xf32>
    %13 = vector.broadcast %11 : vector<1x8xf32> to vector<16x8xf32>
    %14 = arith.addf %12, %13 : vector<16x8xf32>
    %15 = arith.negf %14 : vector<16x8xf32>
    %16 = math.exp %15 : vector<16x8xf32>
    %cst_11 = arith.constant 1.000000e+00 : f32
    %17 = vector.broadcast %cst_11 : f32 to vector<16x8xf32>
    %18 = arith.addf %17, %16 : vector<16x8xf32>
    %19 = arith.divf %17, %18 : vector<16x8xf32>
    %cst_12 = arith.constant 1.100000e+00 : f32
    %20 = vector.broadcast %cst_12 : f32 to vector<16x8xf32>
    %21 = arith.mulf %19, %20 : vector<16x8xf32>
    %cst_13 = arith.constant 4.000000e-01 : f32
    %22 = vector.broadcast %cst_13 : f32 to vector<16x8xf32>
    %23 = arith.addf %21, %22 : vector<16x8xf32>
    %c0_14 = arith.constant 0 : index
    %c0_15 = arith.constant 0 : index
    %24 = vector.load %arg6[%c0_14, %c0_15] : memref<16x8xf32, #tpu.memory_space<vmem>>, vector<16x8xf32>
    tpu.vector_store %arg6[%c0_14, %c0_15], %23 {strides = array<i32>} : memref<16x8xf32, #tpu.memory_space<vmem>>, vector<16x8xf32>,
    return
  }
  func.func @transform_0(%arg0: i32) -> (i32, i32) {
    %c0_i32 = arith.constant 0 : i32
    %c0_i32_0 = arith.constant 0 : i32
    return %arg0, %c0_i32 : i32, i32
  }
  func.func @transform_1(%arg0: i32) -> (i32, i32) {
    %c0_i32 = arith.constant 0 : i32
    %c0_i32_0 = arith.constant 0 : i32
    %c0_i32_1 = arith.constant 0 : i32
    return %c0_i32, %c0_i32_0 : i32, i32
  }
  func.func @transform_2(%arg0: i32) -> (i32, i32) {
    %c0_i32 = arith.constant 0 : i32
    %c0_i32_0 = arith.constant 0 : i32
    %c0_i32_1 = arith.constant 0 : i32
    return %c0_i32, %c0_i32_0 : i32, i32
  }
  func.func @transform_3(%arg0: i32) -> (i32, i32) {
    %c0_i32 = arith.constant 0 : i32
    %c0_i32_0 = arith.constant 0 : i32
    %c0_i32_1 = arith.constant 0 : i32
    return %c0_i32, %c0_i32_0 : i32, i32
  }
  func.func @transform_4(%arg0: i32) -> (i32, i32) {
    %c0_i32 = arith.constant 0 : i32
    %c0_i32_0 = arith.constant 0 : i32
    %c0_i32_1 = arith.constant 0 : i32
    return %c0_i32, %c0_i32_0 : i32, i32
  }
  func.func @transform_5(%arg0: i32) -> (i32, i32) {
    %c0_i32 = arith.constant 0 : i32
    %c0_i32_0 = arith.constant 0 : i32
    return %arg0, %c0_i32 : i32, i32
  }
}

</mosaic_0001>

<llo_original>
// kernel: tpu_custom_call.1
$region0: #{tpu_custom_call.1}
  #allocation0 [shape = 'u32[]', space=smem, size = 0x4, offset = 0x4, fixed_abs, tag = 'smem constant byte address 0x4 - core index']
  #allocation1 [shape = 'u32[144,128]{1,0:T(1,128)}', space=vmem, size = 0x12000, scoped, tag = 'internal scratch']
  %s0 = inlined_call_operand.vmem [shape: f32[16,32], index: 0, kind: input, shape index: {}]
  %s1 = inlined_call_operand.vmem [shape: bf16[32,128], index: 1, kind: input, shape index: {}]
  %s2 = inlined_call_operand.vmem [shape: f32[1,128], index: 2, kind: input, shape index: {}]
  %s3 = inlined_call_operand.vmem [shape: bf16[128,8], index: 3, kind: input, shape index: {}]
  %s4 = inlined_call_operand.vmem [shape: f32[1,8], index: 4, kind: input, shape index: {}]
  %s5 = inlined_call_operand.vmem [shape: f32[16,8], index: 5, kind: output, shape index: {}]
  %s6 = sld [smem:[#allocation0]]
  $region30: #{tpu_custom_call.1} parent=0
    _
  %s8 = ssub.s32 1, %s6
  %s9 = scalar_select 0, %s8, %s6
  // Predicated region
  $region2: #{tpu_custom_call.1} parent=0 // pred_check
    _
  $region3: #{tpu_custom_call.1} parent=0 // pred_check_branch
    %11 = sbr.rel (0) target = $region5
  $region4: #{tpu_custom_call.1} parent=0 // pred_region
    _
  $region5: #{tpu_custom_call.1} parent=0 // pred_fallthru
    _
  // Predicated region
  $region6: #{tpu_custom_call.1} parent=0 // pred_check
    _
  $region7: #{tpu_custom_call.1} parent=0 // pred_check_branch
    %13 = sbr.rel (0) target = $region9
  $region8: #{tpu_custom_call.1} parent=0 // pred_region
    _
  $region9: #{tpu_custom_call.1} parent=0 // pred_fallthru
    _
  // Predicated region
  $region10: #{tpu_custom_call.1} parent=0 // pred_check
    _
  $region11: #{tpu_custom_call.1} parent=0 // pred_check_branch
    %15 = sbr.rel (0) target = $region13
  $region12: #{tpu_custom_call.1} parent=0 // pred_region
    _
  $region13: #{tpu_custom_call.1} parent=0 // pred_fallthru
    _
  // Predicated region
  $region14: #{tpu_custom_call.1} parent=0 // pred_check
    _
  $region15: #{tpu_custom_call.1} parent=0 // pred_check_branch
    %17 = sbr.rel (0) target = $region17
  $region16: #{tpu_custom_call.1} parent=0 // pred_region
    _
  $region17: #{tpu_custom_call.1} parent=0 // pred_fallthru
    _
  // Predicated region
  $region18: #{tpu_custom_call.1} parent=0 // pred_check
    _
  $region19: #{tpu_custom_call.1} parent=0 // pred_check_branch
    %19 = sbr.rel (0) target = $region21
  $region20: #{tpu_custom_call.1} parent=0 // pred_region
    _
  $region21: #{tpu_custom_call.1} parent=0 // pred_fallthru
    _
  %v21 = vld [vmem:[%s0] sm:$0xff]
  %v22 = vld [vmem:[%s0 + $0x8] sm:$0xff]
  %v23 = vpack.c.bf16 %v22, %v21
  %v24 = vld [vmem:[%s1] sm:$0xf]
  %v25 = vld [vmem:[%s1 + $0x4] sm:$0xf]
  %v26 = vld [vmem:[%s1 + $0x8] sm:$0xf]
  %v27 = vld [vmem:[%s1 + $0xc] sm:$0xf]
  %v28 = vld [vmem:[%s2] sm:$0x1]
  %v30 = vlaneseq
  %v31 = vshrl.u32 %v30, 7
  %v32 = vsub.s32 0, %v31
  %v33 = vrot.slane %v28, %v32
  %v39 = vunpack.c.l.b16 %v24
  %v40 = vunpack.c.l.b16 %v25
  %v41 = vunpack.c.l.b16 %v26
  %v42 = vunpack.c.l.b16 %v27
  %v43 = vpack.c.b16 %v40, %v39
  %v44 = vpack.c.b16 %v42, %v41
  %vm47 = vcmask 261120
  %v49 = vsel %vm47, %v23, 0
  %51 = vmatprep.subr.bf16.mxu0 0
  %52 = vmatpush1.bf16.msra.mxu0 %v43
  %53 = vmatprep.subr.bf16.mxu0 0
  %54 = vmatpush1.bf16.msra.mxu0 %v44
  %55 = vmatprep.subr.bf16.mxu0 0
  %56 = vmatpush1.bf16.msra.mxu0 0
  %57 = vmatprep.subr.bf16.mxu0 0
  %58 = vmatpush1.bf16.msra.mxu0 0
  %59 = vmatprep.subr.bf16.mxu0 0
  %60 = vmatpush1.bf16.msra.mxu0 0
  %61 = vmatprep.subr.bf16.mxu0 0
  %62 = vmatpush1.bf16.msra.mxu0 0
  %63 = vmatprep.subr.bf16.mxu0 0
  %64 = vmatpush1.bf16.msra.mxu0 0
  %65 = vmatprep.subr.bf16.mxu0 0
  %66 = vmatpush1.bf16.msra.mxu0 0
  %67 = vmatprep.subr.bf16.mxu0 0
  %68 = vmatpush1.bf16.msra.mxu0 0
  %69 = vmatprep.subr.bf16.mxu0 0
  %70 = vmatpush1.bf16.msra.mxu0 0
  %71 = vmatprep.subr.bf16.mxu0 0
  %72 = vmatpush1.bf16.msra.mxu0 0
  %73 = vmatprep.subr.bf16.mxu0 0
  %74 = vmatpush1.bf16.msra.mxu0 0
  %75 = vmatprep.subr.bf16.mxu0 0
  %76 = vmatpush1.bf16.msra.mxu0 0
  %77 = vmatprep.subr.bf16.mxu0 0
  %78 = vmatpush1.bf16.msra.mxu0 0
  %79 = vmatprep.subr.bf16.mxu0 0
  %80 = vmatpush1.bf16.msra.mxu0 0
  %81 = vmatprep.subr.bf16.mxu0 0
  %82 = vmatpush1.bf16.msra.mxu0 0
  %83 = vmatprep.mubr.bf16.mxu0 0
  %84 = vmatmul.mubr.bf16.gmra.mrb[0].mxu0 %v49
  %v85 = vpop.f32.mrb[0].mxu0
  %v86 = vadd.f32 %v33, %v85
  %v87 = vpop.f32.mrb[0].mxu0
  %v88 = vpop.f32.mrb[0].mxu0
  %v89 = vadd.f32 %v33, %v88
  %v90 = vpop.f32.mrb[0].mxu0
  %91 = vdwg.mxu0
  %v92 = vmax.f32 %v86, 0.0
  %v93 = vmax.f32 %v89, 0.0
  %v94 = vpack.c.bf16 %v93, %v92
  %v95 = vld [vmem:[%s3] sm:$0xf]
  %v96 = vld [vmem:[%s3 + $0x4] sm:$0xf]
  %v97 = vld [vmem:[%s3 + $0x8] sm:$0xf]
  %v98 = vld [vmem:[%s3 + $0xc] sm:$0xf]
  %v99 = vld [vmem:[%s3 + $0x10] sm:$0xf]
  %v100 = vld [vmem:[%s3 + $0x14] sm:$0xf]
  %v101 = vld [vmem:[%s3 + $0x18] sm:$0xf]
  %v102 = vld [vmem:[%s3 + $0x1c] sm:$0xf]
  %v103 = vld [vmem:[%s3 + $0x20] sm:$0xf]
  %v104 = vld [vmem:[%s3 + $0x24] sm:$0xf]
  %v105 = vld [vmem:[%s3 + $0x28] sm:$0xf]
  %v106 = vld [vmem:[%s3 + $0x2c] sm:$0xf]
  %v107 = vld [vmem:[%s3 + $0x30] sm:$0xf]
  %v108 = vld [vmem:[%s3 + $0x34] sm:$0xf]
  %v109 = vld [vmem:[%s3 + $0x38] sm:$0xf]
  %v110 = vld [vmem:[%s3 + $0x3c] sm:$0xf]
  %v111 = vld [vmem:[%s4] sm:$0x1]
  %v113 = vlaneseq
  %v114 = vshrl.u32 %v113, 7
  %v115 = vsub.s32 0, %v114
  %v116 = vrot.slane %v111, %v115
  %v134 = vunpack.c.l.b16 %v95
  %v135 = vunpack.c.l.b16 %v96
  %v136 = vunpack.c.l.b16 %v97
  %v137 = vunpack.c.l.b16 %v98
  %v138 = vunpack.c.l.b16 %v99
  %v139 = vunpack.c.l.b16 %v100
  %v140 = vunpack.c.l.b16 %v101
  %v141 = vunpack.c.l.b16 %v102
  %v142 = vunpack.c.l.b16 %v103
  %v143 = vunpack.c.l.b16 %v104
  %v144 = vunpack.c.l.b16 %v105
  %v145 = vunpack.c.l.b16 %v106
  %v146 = vunpack.c.l.b16 %v107
  %v147 = vunpack.c.l.b16 %v108
  %v148 = vunpack.c.l.b16 %v109
  %v149 = vunpack.c.l.b16 %v110
  %v150 = vpack.c.b16 %v135, %v134
  %v151 = vpack.c.b16 %v137, %v136
  %v152 = vpack.c.b16 %v139, %v138
  %v153 = vpack.c.b16 %v141, %v140
  %v154 = vpack.c.b16 %v143, %v142
  %v155 = vpack.c.b16 %v145, %v144
  %v156 = vpack.c.b16 %v147, %v146
  %v157 = vpack.c.b16 %v149, %v148
  %166 = vmatprep.subr.bf16.mxu0 0
  %167 = vmatpush1.bf16.msra.mxu0 %v150
  %168 = vmatprep.subr.bf16.mxu0 0
  %169 = vmatpush1.bf16.msra.mxu0 %v151
  %170 = vmatprep.subr.bf16.mxu0 0
  %171 = vmatpush1.bf16.msra.mxu0 %v152
  %172 = vmatprep.subr.bf16.mxu0 0
  %173 = vmatpush1.bf16.msra.mxu0 %v153
  %174 = vmatprep.subr.bf16.mxu0 0
  %175 = vmatpush1.bf16.msra.mxu0 %v154
  %176 = vmatprep.subr.bf16.mxu0 0
  %177 = vmatpush1.bf16.msra.mxu0 %v155
  %178 = vmatprep.subr.bf16.mxu0 0
  %179 = vmatpush1.bf16.msra.mxu0 %v156
  %180 = vmatprep.subr.bf16.mxu0 0
  %181 = vmatpush1.bf16.msra.mxu0 %v157
  %182 = vmatprep.subr.bf16.mxu0 0
  %183 = vmatpush1.bf16.msra.mxu0 0
  %184 = vmatprep.subr.bf16.mxu0 0
  %185 = vmatpush1.bf16.msra.mxu0 0
  %186 = vmatprep.subr.bf16.mxu0 0
  %187 = vmatpush1.bf16.msra.mxu0 0
  %188 = vmatprep.subr.bf16.mxu0 0
  %189 = vmatpush1.bf16.msra.mxu0 0
  %190 = vmatprep.subr.bf16.mxu0 0
  %191 = vmatpush1.bf16.msra.mxu0 0
  %192 = vmatprep.subr.bf16.mxu0 0
  %193 = vmatpush1.bf16.msra.mxu0 0
  %194 = vmatprep.subr.bf16.mxu0 0
  %195 = vmatpush1.bf16.msra.mxu0 0
  %196 = vmatprep.subr.bf16.mxu0 0
  %197 = vmatpush1.bf16.msra.mxu0 0
  %198 = vmatprep.mubr.bf16.mxu0 0
  %199 = vmatmul.mubr.bf16.gmra.mrb[0].mxu0 %v94
  %v200 = vpop.f32.mrb[0].mxu0
  %v201 = vadd.f32 %v116, %v200
  %v202 = vpop.f32.mrb[0].mxu0
  %v203 = vpop.f32.mrb[0].mxu0
  %v204 = vadd.f32 %v116, %v203
  %v205 = vpop.f32.mrb[0].mxu0
  %206 = vdwg.mxu0
  %v207 = vxor.u32 %v201, 2147483648
  %v208 = vxor.u32 %v204, 2147483648
  %v209 = vmul.f32 %v207, 1.442695
  %v210 = vpow.pop %v209
  %v211 = vmul.f32 %v208, 1.442695
  %v212 = vpow.pop %v211
  %v213 = vadd.f32 %v210, 1.0
  %v214 = vadd.f32 %v212, 1.0
  %v215 = vrcp.pop %v213
  %v216 = vmul.f32 1.0, %v215
  %v217 = vrcp.pop %v214
  %v218 = vmul.f32 1.0, %v217
  %v219 = vmul.f32 %v216, 1.1
  %v220 = vmul.f32 %v218, 1.1
  %v221 = vadd.f32 %v219, 0.4
  %v222 = vadd.f32 %v220, 0.4
  %vm223 = vcmask 64512
  %224 = vst.msk [vmem:[%s5] sm:$0xff] %vm223, %v221
  %225 = vst.msk [vmem:[%s5 + $0x8] sm:$0xff] %vm223, %v222
  // Predicated region
  $region22: #{tpu_custom_call.1} parent=0 // pred_check
    _
  $region23: #{tpu_custom_call.1} parent=0 // pred_check_branch
    %227 = sbr.rel (0) target = $region25
  $region24: #{tpu_custom_call.1} parent=0 // pred_region
    _
  $region25: #{tpu_custom_call.1} parent=0 // pred_fallthru
    _
  // Predicated region
  $region26: #{tpu_custom_call.1} parent=0 // pred_check
    _
  $region27: #{tpu_custom_call.1} parent=0 // pred_check_branch
    %229 = sbr.rel (0) target = $region29
  $region28: #{tpu_custom_call.1} parent=0 // pred_region
    _
  $region29: #{tpu_custom_call.1} parent=0 // pred_fallthru
    _

</llo_original>
